<compile_context>
chip_gen: v7x
topology: tpu7x:2x2x1
jax: 0.10.0
libtpu: 0.0.40
codegen_flags: <defaults>
</compile_context>

<pallas_src>
import jax
import jax.numpy as jnp
from jax import lax
from jax.experimental import pallas as pl
from jax.experimental.pallas import tpu as pltpu

# ---------------- model hyper-parameters (small, consistent with the module) ----
BATCH = 2
SEQ = 8
HIDDEN = 32
NUM_HEADS = 4
HEAD_DIM = HIDDEN // NUM_HEADS
FF_HIDDEN = 64
TEMB_DIM = 16
LN_EPS = 1e-5  # PyTorch nn.LayerNorm default

# fused / packed-slab geometry
LHS_K = HIDDEN + TEMB_DIM            # 48  : K of the fused [x | silu(t)] matmul
FUSED_N = 2 * HIDDEN                 # 64  : N of the fused matmul
W_COLS = FUSED_N                     # 64
_ROW_FUSED = 0                       # rows [0, 48)   : block-diag [[Wv@Wo,0],[0,Wt]]
_ROW_W1 = LHS_K                      # rows [48, 80)  : W1 (D, FF)
_ROW_W2 = LHS_K + HIDDEN             # rows [80, 144) : W2 (FF, D)
W_ROWS = LHS_K + HIDDEN + FF_HIDDEN  # 144


def _layer_norm(x, gamma, beta, eps=LN_EPS):
    # PyTorch LayerNorm: population variance over last dim, then affine.
    mu = jnp.mean(x, axis=-1, keepdims=True)
    var = jnp.mean((x - mu) ** 2, axis=-1, keepdims=True)
    return (x - mu) * lax.rsqrt(var + eps) * gamma + beta


def hollow_layer_kernel(x_ref, t_ref, w_ref, v_ref, o_ref, lhs_ref):
    x = x_ref[...]                                   # (rows, D) fp32
    t = t_ref[...]                                   # (rows, T) fp32, per-token

    # --- packed weight slab (static row offsets, lane-0 aligned) ---------------
    w_fused = w_ref[_ROW_FUSED:_ROW_FUSED + LHS_K, :]            # (48, 64)
    w1 = w_ref[_ROW_W1:_ROW_W1 + HIDDEN, :]                      # (D, FF) = (32, 64)
    w2 = w_ref[_ROW_W2:_ROW_W2 + FF_HIDDEN, 0:HIDDEN]            # (FF, D) = (64, 32)

    # --- packed bias / gamma / beta slab ----------------------------------------
    b_fused = v_ref[0:1, :]                                       # (1, 64) = [b_vo | bt]
    g1 = v_ref[1:2, 0:HIDDEN]
    be1 = v_ref[2:3, 0:HIDDEN]
    b1 = v_ref[3:4, :]                                            # (1, FF)
    b2 = v_ref[4:5, 0:HIDDEN]
    g2 = v_ref[5:6, 0:HIDDEN]
    be2 = v_ref[6:7, 0:HIDDEN]

    # --- fused attention + temb matmul ------------------------------------------
    # hollow mask keeps only the diagonal -> softmax == identity -> attn(V) == V,
    # so attn_out = x @ (Wv Wo) + (bv Wo + bo).  Fuse it with silu(t) @ Wt + bt
    # via a block-diagonal RHS; LHS = [x | silu(t)] assembled in a VMEM scratch.
    lhs_ref[:, 0:HIDDEN] = x
    lhs_ref[:, HIDDEN:LHS_K] = t * jax.nn.sigmoid(t)              # silu (EUP)
    lhs = lhs_ref[...]                                            # (rows, 48)

    fused = jnp.dot(lhs, w_fused, preferred_element_type=jnp.float32) + b_fused
    attn_out = fused[:, 0:HIDDEN]                                 # (rows, D)
    t_contrib = fused[:, HIDDEN:FUSED_N]                          # (rows, D)

    # --- residual + LayerNorm 1, then add time-embedding contribution -----------
    y = _layer_norm(x + attn_out, g1, be1)
    y = y + t_contrib

    # --- feed-forward ------------------------------------------------------------
    h = jnp.maximum(jnp.dot(y, w1, preferred_element_type=jnp.float32) + b1, 0.0)
    ff = jnp.dot(h, w2, preferred_element_type=jnp.float32) + b2

    # --- residual + LayerNorm 2 ---------------------------------------------------
    o_ref[...] = _layer_norm(y + ff, g2, be2).astype(o_ref.dtype)


def prepare_params(params):
    """One-time parameter preparation (hoisted out of the per-call path).

    Returns two packed slabs that are passed directly to every kernel call:
      slab_w (144, 64): rows [0,48)  block-diag [[Wv@Wo, 0], [0, Wt]]
                        rows [48,80) W1,  rows [80,144) W2
      slab_v (8, 64):   fused bias [b_vo|bt], g1, be1, b1, b2, g2, be2
    All folds are exact."""
    f32 = jnp.float32
    D, T, FF = HIDDEN, TEMB_DIM, FF_HIDDEN

    w_vo = params["wv"] @ params["wo"]                            # (D, D)
    b_vo = params["bv"][0] @ params["wo"] + params["bo"][0]       # (D,)

    slab_w = jnp.zeros((W_ROWS, W_COLS), f32)
    slab_w = slab_w.at[0:D, 0:D].set(w_vo)
    slab_w = slab_w.at[D:D + T, D:2 * D].set(params["wt"])
    slab_w = slab_w.at[_ROW_W1:_ROW_W1 + D, 0:FF].set(params["w1"])
    slab_w = slab_w.at[_ROW_W2:_ROW_W2 + FF, 0:D].set(params["w2"])

    slab_v = jnp.zeros((8, W_COLS), f32)
    slab_v = slab_v.at[0, 0:D].set(b_vo)
    slab_v = slab_v.at[0, D:2 * D].set(params["bt"][0])
    slab_v = slab_v.at[1, 0:D].set(params["g1"][0])
    slab_v = slab_v.at[2, 0:D].set(params["be1"][0])
    slab_v = slab_v.at[3, 0:FF].set(params["b1"][0])
    slab_v = slab_v.at[4, 0:D].set(params["b2"][0])
    slab_v = slab_v.at[5, 0:D].set(params["g2"][0])
    slab_v = slab_v.at[6, 0:D].set(params["be2"][0])
    return slab_w, slab_v


@jax.jit
def hollow_transformer_layer(x, temb, slab_w, slab_v):
    B, S, D = x.shape
    T = temb.shape[1]
    rows = B * S
    f32 = jnp.float32

    x2 = x.reshape(rows, D)
    t2 = jnp.repeat(temb, S, axis=0)      # (rows, T) per-token temb (tiny, data-dependent)

    out2 = pl.pallas_call(
        hollow_layer_kernel,
        out_shape=jax.ShapeDtypeStruct((rows, D), f32),
        grid_spec=pltpu.PrefetchScalarGridSpec(
            num_scalar_prefetch=0,
            grid=(1,),                    # single step on all chips: work is tiny,
            in_specs=[                    # a 2-TC split would just duplicate DMAs
                pl.BlockSpec((rows, D), lambda i: (0, 0)),           # x rows
                pl.BlockSpec((rows, T), lambda i: (0, 0)),           # per-token temb
                pl.BlockSpec((W_ROWS, W_COLS), lambda i: (0, 0)),    # weight slab
                pl.BlockSpec((8, W_COLS), lambda i: (0, 0)),         # vector slab
            ],
            out_specs=pl.BlockSpec((rows, D), lambda i: (0, 0)),
            scratch_shapes=[pltpu.VMEM((rows, LHS_K), f32)],         # fused-LHS buffer
        ),
        compiler_params=pltpu.CompilerParams(
            dimension_semantics=("arbitrary",),
        ),
        cost_estimate=pl.CostEstimate(
            flops=240_000, transcendentals=320, bytes_accessed=44_032),
    )(x2, t2, slab_w, slab_v)
    return out2.reshape(B, S, D)


# ------------------------------ pure-JAX reference ------------------------------
# Full-fidelity reference (keeps Q/K projections, hollow mask and softmax) to
# verify that the algebraic simplifications inside the kernel are exact.
def reference(x, temb, params):
    B, S, D = x.shape
    hd = HEAD_DIM
    q = x @ params["wq"] + params["bq"][0]
    k = x @ params["wk"] + params["bk"][0]
    v = x @ params["wv"] + params["bv"][0]

    def split(t):
        return t.reshape(B, S, NUM_HEADS, hd).transpose(0, 2, 1, 3)

    q, k, v = split(q), split(k), split(v)
    scores = jnp.einsum("bhqd,bhkd->bhqk", q, k) / jnp.sqrt(jnp.float32(hd))
    eye = jnp.eye(S, dtype=bool)
    scores = jnp.where(eye[None, None], scores, -jnp.inf)
    attn = jax.nn.softmax(scores, axis=-1)
    ctx = jnp.einsum("bhqk,bhkd->bhqd", attn, v).transpose(0, 2, 1, 3).reshape(B, S, D)
    attn_out = ctx @ params["wo"] + params["bo"][0]

    y = _layer_norm(x + attn_out, params["g1"][0], params["be1"][0])
    t = temb * jax.nn.sigmoid(temb)
    y = y + (t @ params["wt"] + params["bt"][0])[:, None, :]
    ff = jnp.maximum(y @ params["w1"] + params["b1"][0], 0.0) @ params["w2"] + params["b2"][0]
    return _layer_norm(y + ff, params["g2"][0], params["be2"][0])


def make_params(key):
    ks = jax.random.split(key, 12)
    f32 = jnp.float32

    def lin(k, din, dout, scale=0.05):
        return jax.random.normal(k, (din, dout), f32) * scale

    params = {
        "wq": lin(ks[0], HIDDEN, HIDDEN), "bq": jax.random.normal(ks[1], (1, HIDDEN), f32) * 0.01,
        "wk": lin(ks[2], HIDDEN, HIDDEN), "bk": jax.random.normal(ks[3], (1, HIDDEN), f32) * 0.01,
        "wv": lin(ks[4], HIDDEN, HIDDEN), "bv": jax.random.normal(ks[5], (1, HIDDEN), f32) * 0.01,
        "wo": lin(ks[6], HIDDEN, HIDDEN), "bo": jax.random.normal(ks[7], (1, HIDDEN), f32) * 0.01,
        "g1": jnp.ones((1, HIDDEN), f32), "be1": jnp.zeros((1, HIDDEN), f32),
        "wt": lin(ks[8], TEMB_DIM, HIDDEN), "bt": jnp.zeros((1, HIDDEN), f32),  # dense0 bias init zeros
        "w1": lin(ks[9], HIDDEN, FF_HIDDEN), "b1": jax.random.normal(ks[10], (1, FF_HIDDEN), f32) * 0.01,
        "w2": lin(ks[11], FF_HIDDEN, HIDDEN), "b2": jnp.zeros((1, HIDDEN), f32),
        "g2": jnp.ones((1, HIDDEN), f32), "be2": jnp.zeros((1, HIDDEN), f32),
    }
    return params


if __name__ == "__main__":
    key = jax.random.PRNGKey(0)
    kx, kt, kp = jax.random.split(key, 3)
    x = jax.random.normal(kx, (BATCH, SEQ, HIDDEN), jnp.float32)
    temb = jax.random.normal(kt, (BATCH, TEMB_DIM), jnp.float32)
    params = make_params(kp)

    # One-time parameter preparation (hoisted out of the per-call hot path).
    slab_w, slab_v = prepare_params(params)
    slab_w = jax.block_until_ready(slab_w)
    slab_v = jax.block_until_ready(slab_v)

    out = hollow_transformer_layer(x, temb, slab_w, slab_v)
    out = jax.block_until_ready(out)

    ref = reference(x, temb, params)
    assert out.shape == (BATCH, SEQ, HIDDEN)
    assert jnp.allclose(out, ref, atol=1e-4, rtol=1e-4), "mismatch vs pure-JAX reference"
    print("KERNEL_OK")
</pallas_src>

<mosaic_0001>
module attributes {stable_mosaic.version = 11 : i64} {
  func.func @hollow_layer_kernel(%arg0: i32, %arg1: memref<16x32xf32, #tpu.memory_space<vmem>>, %arg2: memref<16x16xf32, #tpu.memory_space<vmem>>, %arg3: memref<144x64xf32, #tpu.memory_space<vmem>>, %arg4: memref<8x64xf32, #tpu.memory_space<vmem>>, %arg5: memref<16x32xf32, #tpu.memory_space<vmem>>, %arg6: memref<16x48xf32, #tpu.memory_space<vmem>>) attributes {dimension_semantics = [#tpu.dimension_semantics<arbitrary>], iteration_bounds = array<i64: 1>, scalar_prefetch = 0 : i64, scratch_operands = 1 : i64, tpu.core_type = #tpu.core_type<tc>, window_params = [{pipeline_mode = #tpu.pipeline_mode<synchronous>, transform_indices = @transform_0, window_bounds = array<i64: 16, 32>}, {pipeline_mode = #tpu.pipeline_mode<synchronous>, transform_indices = @transform_1, window_bounds = array<i64: 16, 16>}, {pipeline_mode = #tpu.pipeline_mode<synchronous>, transform_indices = @transform_2, window_bounds = array<i64: 144, 64>}, {pipeline_mode = #tpu.pipeline_mode<synchronous>, transform_indices = @transform_3, window_bounds = array<i64: 8, 64>}, {pipeline_mode = #tpu.pipeline_mode<synchronous>, transform_indices = @transform_4, window_bounds = array<i64: 16, 32>}]} {
    %c0 = arith.constant 0 : index
    %c0_0 = arith.constant 0 : index
    %0 = vector.load %arg1[%c0, %c0_0] : memref<16x32xf32, #tpu.memory_space<vmem>>, vector<16x32xf32>
    %c0_1 = arith.constant 0 : index
    %c0_2 = arith.constant 0 : index
    %1 = vector.load %arg2[%c0_1, %c0_2] : memref<16x16xf32, #tpu.memory_space<vmem>>, vector<16x16xf32>
    %c0_3 = arith.constant 0 : index
    %c0_4 = arith.constant 0 : index
    %2 = vector.load %arg3[%c0_3, %c0_4] : memref<144x64xf32, #tpu.memory_space<vmem>>, vector<48x64xf32>
    %c48 = arith.constant 48 : index
    %c0_5 = arith.constant 0 : index
    %3 = vector.load %arg3[%c48, %c0_5] : memref<144x64xf32, #tpu.memory_space<vmem>>, vector<32x64xf32>
    %c80 = arith.constant 80 : index
    %c0_6 = arith.constant 0 : index
    %4 = vector.load %arg3[%c80, %c0_6] : memref<144x64xf32, #tpu.memory_space<vmem>>, vector<64x32xf32>
    %c0_7 = arith.constant 0 : index
    %c0_8 = arith.constant 0 : index
    %5 = vector.load %arg4[%c0_7, %c0_8] : memref<8x64xf32, #tpu.memory_space<vmem>>, vector<1x64xf32>
    %c1 = arith.constant 1 : index
    %c0_9 = arith.constant 0 : index
    %6 = vector.load %arg4[%c1, %c0_9] : memref<8x64xf32, #tpu.memory_space<vmem>>, vector<1x32xf32>
    %c2 = arith.constant 2 : index
    %c0_10 = arith.constant 0 : index
    %7 = vector.load %arg4[%c2, %c0_10] : memref<8x64xf32, #tpu.memory_space<vmem>>, vector<1x32xf32>
    %c3 = arith.constant 3 : index
    %c0_11 = arith.constant 0 : index
    %8 = vector.load %arg4[%c3, %c0_11] : memref<8x64xf32, #tpu.memory_space<vmem>>, vector<1x64xf32>
    %c4 = arith.constant 4 : index
    %c0_12 = arith.constant 0 : index
    %9 = vector.load %arg4[%c4, %c0_12] : memref<8x64xf32, #tpu.memory_space<vmem>>, vector<1x32xf32>
    %c5 = arith.constant 5 : index
    %c0_13 = arith.constant 0 : index
    %10 = vector.load %arg4[%c5, %c0_13] : memref<8x64xf32, #tpu.memory_space<vmem>>, vector<1x32xf32>
    %c6 = arith.constant 6 : index
    %c0_14 = arith.constant 0 : index
    %11 = vector.load %arg4[%c6, %c0_14] : memref<8x64xf32, #tpu.memory_space<vmem>>, vector<1x32xf32>
    %c0_15 = arith.constant 0 : index
    %c0_16 = arith.constant 0 : index
    %12 = vector.load %arg6[%c0_15, %c0_16] : memref<16x48xf32, #tpu.memory_space<vmem>>, vector<16x32xf32>
    tpu.vector_store %arg6[%c0_15, %c0_16], %0 {strides = array<i32>} : memref<16x48xf32, #tpu.memory_space<vmem>>, vector<16x32xf32>,
    %13 = arith.negf %1 : vector<16x16xf32>
    %14 = math.exp %13 : vector<16x16xf32>
    %cst = arith.constant 1.000000e+00 : f32
    %15 = vector.broadcast %cst : f32 to vector<16x16xf32>
    %16 = arith.addf %15, %14 : vector<16x16xf32>
    %17 = arith.divf %15, %16 : vector<16x16xf32>
    %18 = arith.mulf %1, %17 : vector<16x16xf32>
    %c0_17 = arith.constant 0 : index
    %c32 = arith.constant 32 : index
    %19 = vector.load %arg6[%c0_17, %c32] : memref<16x48xf32, #tpu.memory_space<vmem>>, vector<16x16xf32>
    tpu.vector_store %arg6[%c0_17, %c32], %18 {strides = array<i32>} : memref<16x48xf32, #tpu.memory_space<vmem>>, vector<16x16xf32>,
    %c0_18 = arith.constant 0 : index
    %c0_19 = arith.constant 0 : index
    %20 = vector.load %arg6[%c0_18, %c0_19] : memref<16x48xf32, #tpu.memory_space<vmem>>, vector<16x48xf32>
    %cst_20 = arith.constant dense<0.000000e+00> : vector<16x64xf32>
    %21 = tpu.matmul %20, %2, %cst_20 {dimension_numbers = #tpu.dot_dimension_numbers<[1], [0], [0], [1], [0, 0, 1, 1], [], []>} : vector<16x48xf32>, vector<48x64xf32>, vector<16x64xf32> -> vector<16x64xf32>
    %22 = vector.broadcast %5 : vector<1x64xf32> to vector<16x64xf32>
    %23 = arith.addf %21, %22 : vector<16x64xf32>
    %24 = vector.extract_strided_slice %23 {offsets = [0, 0], sizes = [16, 32], strides = [1, 1]} : vector<16x64xf32> to vector<16x32xf32>
    %25 = vector.extract_strided_slice %23 {offsets = [0, 32], sizes = [16, 32], strides = [1, 1]} : vector<16x64xf32> to vector<16x32xf32>
    %26 = arith.addf %0, %24 : vector<16x32xf32>
    %cst_21 = arith.constant dense<0.000000e+00> : vector<16xf32>
    %27 = vector.multi_reduction <add>, %26, %cst_21 [1] : vector<16x32xf32> to vector<16xf32>
    %28 = vector.shape_cast %27 : vector<16xf32> to vector<16x1xf32>
    %cst_22 = arith.constant 3.200000e+01 : f32
    %29 = vector.broadcast %cst_22 : f32 to vector<16x1xf32>
    %30 = arith.divf %28, %29 : vector<16x1xf32>
    %31 = vector.broadcast %30 : vector<16x1xf32> to vector<16x32xf32>
    %32 = arith.subf %26, %31 : vector<16x32xf32>
    %33 = arith.mulf %32, %32 : vector<16x32xf32>
    %cst_23 = arith.constant dense<0.000000e+00> : vector<16xf32>
    %34 = vector.multi_reduction <add>, %33, %cst_23 [1] : vector<16x32xf32> to vector<16xf32>
    %35 = vector.shape_cast %34 : vector<16xf32> to vector<16x1xf32>
    %cst_24 = arith.constant 3.200000e+01 : f32
    %36 = vector.broadcast %cst_24 : f32 to vector<16x1xf32>
    %37 = arith.divf %35, %36 : vector<16x1xf32>
    %38 = vector.broadcast %30 : vector<16x1xf32> to vector<16x32xf32>
    %39 = arith.subf %26, %38 : vector<16x32xf32>
    %cst_25 = arith.constant 9.99999974E-6 : f32
    %40 = vector.broadcast %cst_25 : f32 to vector<16x1xf32>
    %41 = arith.addf %37, %40 : vector<16x1xf32>
    %42 = math.rsqrt %41 : vector<16x1xf32>
    %43 = vector.broadcast %42 : vector<16x1xf32> to vector<16x32xf32>
    %44 = arith.mulf %39, %43 : vector<16x32xf32>
    %45 = vector.broadcast %6 : vector<1x32xf32> to vector<16x32xf32>
    %46 = arith.mulf %44, %45 : vector<16x32xf32>
    %47 = vector.broadcast %7 : vector<1x32xf32> to vector<16x32xf32>
    %48 = arith.addf %46, %47 : vector<16x32xf32>
    %49 = arith.addf %48, %25 : vector<16x32xf32>
    %cst_26 = arith.constant dense<0.000000e+00> : vector<16x64xf32>
    %50 = tpu.matmul %49, %3, %cst_26 {dimension_numbers = #tpu.dot_dimension_numbers<[1], [0], [0], [1], [0, 0, 1, 1], [], []>} : vector<16x32xf32>, vector<32x64xf32>, vector<16x64xf32> -> vector<16x64xf32>
    %51 = vector.broadcast %8 : vector<1x64xf32> to vector<16x64xf32>
    %52 = arith.addf %50, %51 : vector<16x64xf32>
    %cst_27 = arith.constant 0.000000e+00 : f32
    %53 = vector.broadcast %cst_27 : f32 to vector<16x64xf32>
    %54 = arith.maximumf %52, %53 : vector<16x64xf32>
    %cst_28 = arith.constant dense<0.000000e+00> : vector<16x32xf32>
    %55 = tpu.matmul %54, %4, %cst_28 {dimension_numbers = #tpu.dot_dimension_numbers<[1], [0], [0], [1], [0, 0, 1, 1], [], []>} : vector<16x64xf32>, vector<64x32xf32>, vector<16x32xf32> -> vector<16x32xf32>
    %56 = vector.broadcast %9 : vector<1x32xf32> to vector<16x32xf32>
    %57 = arith.addf %55, %56 : vector<16x32xf32>
    %58 = arith.addf %49, %57 : vector<16x32xf32>
    %cst_29 = arith.constant dense<0.000000e+00> : vector<16xf32>
    %59 = vector.multi_reduction <add>, %58, %cst_29 [1] : vector<16x32xf32> to vector<16xf32>
    %60 = vector.shape_cast %59 : vector<16xf32> to vector<16x1xf32>
    %cst_30 = arith.constant 3.200000e+01 : f32
    %61 = vector.broadcast %cst_30 : f32 to vector<16x1xf32>
    %62 = arith.divf %60, %61 : vector<16x1xf32>
    %63 = vector.broadcast %62 : vector<16x1xf32> to vector<16x32xf32>
    %64 = arith.subf %58, %63 : vector<16x32xf32>
    %65 = arith.mulf %64, %64 : vector<16x32xf32>
    %cst_31 = arith.constant dense<0.000000e+00> : vector<16xf32>
    %66 = vector.multi_reduction <add>, %65, %cst_31 [1] : vector<16x32xf32> to vector<16xf32>
    %67 = vector.shape_cast %66 : vector<16xf32> to vector<16x1xf32>
    %cst_32 = arith.constant 3.200000e+01 : f32
    %68 = vector.broadcast %cst_32 : f32 to vector<16x1xf32>
    %69 = arith.divf %67, %68 : vector<16x1xf32>
    %70 = vector.broadcast %62 : vector<16x1xf32> to vector<16x32xf32>
    %71 = arith.subf %58, %70 : vector<16x32xf32>
    %cst_33 = arith.constant 9.99999974E-6 : f32
    %72 = vector.broadcast %cst_33 : f32 to vector<16x1xf32>
    %73 = arith.addf %69, %72 : vector<16x1xf32>
    %74 = math.rsqrt %73 : vector<16x1xf32>
    %75 = vector.broadcast %74 : vector<16x1xf32> to vector<16x32xf32>
    %76 = arith.mulf %71, %75 : vector<16x32xf32>
    %77 = vector.broadcast %10 : vector<1x32xf32> to vector<16x32xf32>
    %78 = arith.mulf %76, %77 : vector<16x32xf32>
    %79 = vector.broadcast %11 : vector<1x32xf32> to vector<16x32xf32>
    %80 = arith.addf %78, %79 : vector<16x32xf32>
    %c0_34 = arith.constant 0 : index
    %c0_35 = arith.constant 0 : index
    %81 = vector.load %arg5[%c0_34, %c0_35] : memref<16x32xf32, #tpu.memory_space<vmem>>, vector<16x32xf32>
    tpu.vector_store %arg5[%c0_34, %c0_35], %80 {strides = array<i32>} : memref<16x32xf32, #tpu.memory_space<vmem>>, vector<16x32xf32>,
    return
  }
  func.func @transform_0(%arg0: i32) -> (i32, i32) {
    %c0_i32 = arith.constant 0 : i32
    %c0_i32_0 = arith.constant 0 : i32
    %c0_i32_1 = arith.constant 0 : i32
    return %c0_i32, %c0_i32_0 : i32, i32
  }
  func.func @transform_1(%arg0: i32) -> (i32, i32) {
    %c0_i32 = arith.constant 0 : i32
    %c0_i32_0 = arith.constant 0 : i32
    %c0_i32_1 = arith.constant 0 : i32
    return %c0_i32, %c0_i32_0 : i32, i32
  }
  func.func @transform_2(%arg0: i32) -> (i32, i32) {
    %c0_i32 = arith.constant 0 : i32
    %c0_i32_0 = arith.constant 0 : i32
    %c0_i32_1 = arith.constant 0 : i32
    return %c0_i32, %c0_i32_0 : i32, i32
  }
  func.func @transform_3(%arg0: i32) -> (i32, i32) {
    %c0_i32 = arith.constant 0 : i32
    %c0_i32_0 = arith.constant 0 : i32
    %c0_i32_1 = arith.constant 0 : i32
    return %c0_i32, %c0_i32_0 : i32, i32
  }
  func.func @transform_4(%arg0: i32) -> (i32, i32) {
    %c0_i32 = arith.constant 0 : i32
    %c0_i32_0 = arith.constant 0 : i32
    %c0_i32_1 = arith.constant 0 : i32
    return %c0_i32, %c0_i32_0 : i32, i32
  }
}

</mosaic_0001>

<llo_original>
// kernel: hollow_transformer_layer.1
$region0: #{hollow_transformer_layer.1}
  #allocation0 [shape = 'u32[]', space=smem, size = 0x4, offset = 0x4, fixed_abs, tag = 'smem constant byte address 0x4 - core index']
  #allocation1 [shape = 'u32[144,128]{1,0:T(1,128)}', space=vmem, size = 0x12000, scoped, tag = 'internal scratch']
  #allocation2 [shape = 'f32[16,48]{1,0:T(8,128)}', space=vmem, size = 0x2000, scoped, tag = 'scratch operand']
  %s0 = inlined_call_operand.vmem [shape: f32[16,32], index: 0, kind: input, shape index: {}]
  %s1 = inlined_call_operand.vmem [shape: f32[16,16], index: 1, kind: input, shape index: {}]
  %s2 = inlined_call_operand.vmem [shape: f32[144,64], index: 2, kind: input, shape index: {}]
  %s3 = inlined_call_operand.vmem [shape: f32[8,64], index: 3, kind: input, shape index: {}]
  %s4 = inlined_call_operand.hbm [shape: f32[16,32], index: 4, kind: output, shape index: {}]
  %s5 = sld [smem:[#allocation0]]
  $region26: #{hollow_transformer_layer.1} parent=0
    _
  %s7 = ssub.s32 1, %s5
  %s8 = scalar_select 0, %s7, %s5
  $region1: #{hollow_transformer_layer.1} parent=0
    #allocation3 [shape = 'u8[8192]{0}', space=vmem, size = 0x2000, scoped, tag = 'output window, operand 0, single buffered']
    #allocation4 [shape = 's32[1]{0}', space=sflag, size = 0x4, scoped, tag = 'scoped memory for hollow_transformer_layer.1']
    %9 = vsyncpa [#allocation4], 0
    // Predicated region
    $region2: #{hollow_transformer_layer.1} parent=1 // pred_check
      _
    $region3: #{hollow_transformer_layer.1} parent=1 // pred_check_branch
      %11 = sbr.rel (0) target = $region5
    $region4: #{hollow_transformer_layer.1} parent=1 // pred_region
      _
    $region5: #{hollow_transformer_layer.1} parent=1 // pred_fallthru
      _
    // Predicated region
    $region6: #{hollow_transformer_layer.1} parent=1 // pred_check
      _
    $region7: #{hollow_transformer_layer.1} parent=1 // pred_check_branch
      %13 = sbr.rel (0) target = $region9
    $region8: #{hollow_transformer_layer.1} parent=1 // pred_region
      _
    $region9: #{hollow_transformer_layer.1} parent=1 // pred_fallthru
      _
    // Predicated region
    $region10: #{hollow_transformer_layer.1} parent=1 // pred_check
      _
    $region11: #{hollow_transformer_layer.1} parent=1 // pred_check_branch
      %15 = sbr.rel (0) target = $region13
    $region12: #{hollow_transformer_layer.1} parent=1 // pred_region
      _
    $region13: #{hollow_transformer_layer.1} parent=1 // pred_fallthru
      _
    // Predicated region
    $region14: #{hollow_transformer_layer.1} parent=1 // pred_check
      _
    $region15: #{hollow_transformer_layer.1} parent=1 // pred_check_branch
      %17 = sbr.rel (0) target = $region17
    $region16: #{hollow_transformer_layer.1} parent=1 // pred_region
      _
    $region17: #{hollow_transformer_layer.1} parent=1 // pred_fallthru
      _
    %v18 = vld [vmem:[%s0] sm:$0xff]
    %v19 = vld [vmem:[%s0 + $0x8] sm:$0xff]
    %v20 = vld [vmem:[%s1] sm:$0xff]
    %v21 = vld [vmem:[%s1 + $0x8] sm:$0xff]
    %v22 = vld [vmem:[%s2] sm:$0xff]
    %v23 = vld [vmem:[%s2 + $0x8] sm:$0xff]
    %v24 = vld [vmem:[%s2 + $0x10] sm:$0xff]
    %v25 = vld [vmem:[%s2 + $0x18] sm:$0xff]
    %v26 = vld [vmem:[%s2 + $0x20] sm:$0xff]
    %v27 = vld [vmem:[%s2 + $0x28] sm:$0xff]
    %v28 = vld [vmem:[%s2 + $0x30] sm:$0xff]
    %v29 = vld [vmem:[%s2 + $0x38] sm:$0xff]
    %v30 = vld [vmem:[%s2 + $0x40] sm:$0xff]
    %v31 = vld [vmem:[%s2 + $0x48] sm:$0xff]
    %v32 = vld [vmem:[%s2 + $0x50] sm:$0xff]
    %v33 = vld [vmem:[%s2 + $0x58] sm:$0xff]
    %v34 = vld [vmem:[%s2 + $0x60] sm:$0xff]
    %v35 = vld [vmem:[%s2 + $0x68] sm:$0xff]
    %v36 = vld [vmem:[%s2 + $0x70] sm:$0xff]
    %v37 = vld [vmem:[%s2 + $0x78] sm:$0xff]
    %v38 = vld [vmem:[%s2 + $0x80] sm:$0xff]
    %v39 = vld [vmem:[%s2 + $0x88] sm:$0xff]
    %v40 = vld [vmem:[%s3] sm:$0x1]
    %v41 = vld [vmem:[%s3 + $0x1] sm:$0x1]
    %v42 = vld [vmem:[%s3 + $0x2] sm:$0x1]
    %v43 = vld [vmem:[%s3 + $0x3] sm:$0x1]
    %v44 = vld [vmem:[%s3 + $0x4] sm:$0x1]
    %v45 = vld [vmem:[%s3 + $0x5] sm:$0x1]
    %v46 = vld [vmem:[%s3 + $0x6] sm:$0x1]
    %vm47 = vcmask 261120
    %48 = vst.msk [vmem:[#allocation2] sm:$0xff] %vm47, %v18
    %49 = vst.msk [vmem:[#allocation2 + $0x8] sm:$0xff] %vm47, %v19
    %v50 = vxor.u32 %v20, 2147483648
    %v51 = vxor.u32 %v21, 2147483648
    %v52 = vmul.f32 %v50, 1.442695
    %v53 = vpow.pop %v52
    %v54 = vmul.f32 %v51, 1.442695
    %v55 = vpow.pop %v54
    %v56 = vadd.f32 %v53, 1.0
    %v57 = vadd.f32 %v55, 1.0
    %v58 = vrcp.pop %v56
    %v59 = vmul.f32 1.0, %v58
    %v60 = vrcp.pop %v57
    %v61 = vmul.f32 1.0, %v60
    %v62 = vmul.f32 %v20, %v59
    %v63 = vmul.f32 %v21, %v61
    %66 = vrot.lane.b32.xlu0 %v62, 32
    %v67 = vpop.permute.xlu0 %66
    %68 = vrot.lane.b32.xlu0 %v63, 32
    %v69 = vpop.permute.xlu0 %68
    %vm72 = vcmask 392448
    %73 = vst.msk [vmem:[#allocation2] sm:$0xff] %vm72, %v67
    %74 = vst.msk [vmem:[#allocation2 + $0x8] sm:$0xff] %vm72, %v69
    %v75 = vld [vmem:[#allocation2] sm:$0xff]
    %v76 = vld [vmem:[#allocation2 + $0x8] sm:$0xff]
    %v77 = vlaneseq
    %v78 = vshrl.u32 %v77, 7
    %v79 = vsub.s32 0, %v78
    %v80 = vrot.slane %v40, %v79
    %vm81 = vcmask 392192
    %v83 = vsel %vm81, %v75, 0
    %v86 = vsel %vm81, %v76, 0
    %88 = vmatprep.subr.mxu0 0.0
    %89 = vmatpush1.msra.mxu0 %v22
    %90 = vmatprep.subr.mxu0 0.0
    %91 = vmatpush1.msra.mxu0 %v23
    %92 = vmatprep.subr.mxu0 0.0
    %93 = vmatpush1.msra.mxu0 %v24
    %94 = vmatprep.subr.mxu0 0.0
    %95 = vmatpush1.msra.mxu0 %v25
    %96 = vmatprep.subr.mxu0 0.0
    %97 = vmatpush1.msra.mxu0 %v26
    %98 = vmatprep.subr.mxu0 0.0
    %99 = vmatpush1.msra.mxu0 %v27
    %100 = vmatprep.subr.mxu0 0.0
    %101 = vmatpush1.msra.mxu0 0.0
    %102 = vmatprep.subr.mxu0 0.0
    %103 = vmatpush1.msra.mxu0 0.0
    %104 = vmatprep.subr.mxu0 0.0
    %105 = vmatpush1.msra.mxu0 0.0
    %106 = vmatprep.subr.mxu0 0.0
    %107 = vmatpush1.msra.mxu0 0.0
    %108 = vmatprep.subr.mxu0 0.0
    %109 = vmatpush1.msra.mxu0 0.0
    %110 = vmatprep.subr.mxu0 0.0
    %111 = vmatpush1.msra.mxu0 0.0
    %112 = vmatprep.subr.mxu0 0.0
    %113 = vmatpush1.msra.mxu0 0.0
    %114 = vmatprep.subr.mxu0 0.0
    %115 = vmatpush1.msra.mxu0 0.0
    %116 = vmatprep.subr.mxu0 0.0
    %117 = vmatpush1.msra.mxu0 0.0
    %118 = vmatprep.subr.mxu0 0.0
    %119 = vmatpush1.msra.mxu0 0.0
    %120 = vmatprep.subr.mxu0 0.0
    %121 = vmatpush1.msra.mxu0 0.0
    %122 = vmatprep.subr.mxu0 0.0
    %123 = vmatpush1.msra.mxu0 0.0
    %124 = vmatprep.subr.mxu0 0.0
    %125 = vmatpush1.msra.mxu0 0.0
    %126 = vmatprep.subr.mxu0 0.0
    %127 = vmatpush1.msra.mxu0 0.0
    %128 = vmatprep.subr.mxu0 0.0
    %129 = vmatpush1.msra.mxu0 0.0
    %130 = vmatprep.subr.mxu0 0.0
    %131 = vmatpush1.msra.mxu0 0.0
    %132 = vmatprep.subr.mxu0 0.0
    %133 = vmatpush1.msra.mxu0 0.0
    %134 = vmatprep.subr.mxu0 0.0
    %135 = vmatpush1.msra.mxu0 0.0
    %136 = vmatprep.subr.mxu0 0.0
    %137 = vmatpush1.msra.mxu0 0.0
    %138 = vmatprep.subr.mxu0 0.0
    %139 = vmatpush1.msra.mxu0 0.0
    %140 = vmatprep.subr.mxu0 0.0
    %141 = vmatpush1.msra.mxu0 0.0
    %142 = vmatprep.subr.mxu0 0.0
    %143 = vmatpush1.msra.mxu0 0.0
    %144 = vmatprep.subr.mxu0 0.0
    %145 = vmatpush1.msra.mxu0 0.0
    %146 = vmatprep.subr.mxu0 0.0
    %147 = vmatpush1.msra.mxu0 0.0
    %148 = vmatprep.subr.mxu0 0.0
    %149 = vmatpush1.msra.mxu0 0.0
    %150 = vmatprep.subr.mxu0 0.0
    %151 = vmatpush1.msra.mxu0 0.0
    %152 = vmatprep.mubr.f32.mxu0 0.0
    %153 = vmatmul.mubr.f32.gmra.mrb[0].mxu0 %v83
    %v154 = vpop.f32.mrb[0].mxu0
    %v155 = vadd.f32 %v80, %v154
    %v156 = vpop.f32.mrb[0].mxu0
    %157 = vmatprep.mubr.f32.mxu0 0.0
    %158 = vmatmul.mubr.f32.gmra.mrb[0].mxu0 %v86
    %v159 = vpop.f32.mrb[0].mxu0
    %v160 = vadd.f32 %v80, %v159
    %v161 = vpop.f32.mrb[0].mxu0
    %162 = vdwg.mxu0
    %v163 = vadd.f32 %v18, %v155
    %v164 = vadd.f32 %v19, %v160
    %v165 = vsel %vm47, %v163, 0.0
    %166 = vadd.xlane.f32.xlu0 %v165
    %v167 = vpop.xlane.xlu0 %166
    %v168 = vsel %vm47, %v164, 0.0
    %169 = vadd.xlane.f32.xlu0 %v168
    %v170 = vpop.xlane.xlu0 %169
    %v171 = vrcp.pop 32.0
    %v172 = vmul.f32 %v167, %v171
    %v173 = vmul.f32 %v170, %v171
    %v174 = vsub.f32 %v163, %v172
    %v175 = vsub.f32 %v164, %v173
    %v176 = vmul.f32 %v174, %v174
    %v177 = vmul.f32 %v175, %v175
    %v178 = vsel %vm47, %v176, 0.0
    %179 = vadd.xlane.f32.xlu0 %v178
    %v180 = vpop.xlane.xlu0 %179
    %v181 = vsel %vm47, %v177, 0.0
    %182 = vadd.xlane.f32.xlu0 %v181
    %v183 = vpop.xlane.xlu0 %182
    %v184 = vmul.f32 %v180, %v171
    %v185 = vmul.f32 %v183, %v171
    %v186 = vadd.f32 %v184, 1e-05
    %v187 = vadd.f32 %v185, 1e-05
    %v188 = vrsqrt.pop %v186
    %v189 = vrsqrt.pop %v187
    %v190 = vmul.f32 %v174, %v188
    %v191 = vmul.f32 %v175, %v189
    %v192 = vlaneseq
    %v193 = vshrl.u32 %v192, 7
    %v194 = vsub.s32 0, %v193
    %v195 = vrot.slane %v41, %v194
    %v196 = vmul.f32 %v190, %v195
    %v197 = vmul.f32 %v191, %v195
    %v198 = vlaneseq
    %v199 = vshrl.u32 %v198, 7
    %v200 = vsub.s32 0, %v199
    %v201 = vrot.slane %v42, %v200
    %v202 = vadd.f32 %v196, %v201
    %v203 = vadd.f32 %v197, %v201
    %206 = vrot.lane.b32.xlu0 %v155, 96
    %v207 = vpop.permute.xlu0 %206
    %208 = vrot.lane.b32.xlu0 %v160, 96
    %v209 = vpop.permute.xlu0 %208
    %v212 = vadd.f32 %v202, %v207
    %v213 = vadd.f32 %v203, %v209
    %v214 = vlaneseq
    %v215 = vshrl.u32 %v214, 7
    %v216 = vsub.s32 0, %v215
    %v217 = vrot.slane %v43, %v216
    %v219 = vsel %vm47, %v212, 0
    %v222 = vsel %vm47, %v213, 0
    %224 = vmatprep.subr.mxu0 0.0
    %225 = vmatpush1.msra.mxu0 %v28
    %226 = vmatprep.subr.mxu0 0.0
    %227 = vmatpush1.msra.mxu0 %v29
    %228 = vmatprep.subr.mxu0 0.0
    %229 = vmatpush1.msra.mxu0 %v30
    %230 = vmatprep.subr.mxu0 0.0
    %231 = vmatpush1.msra.mxu0 %v31
    %232 = vmatprep.subr.mxu0 0.0
    %233 = vmatpush1.msra.mxu0 0.0
    %234 = vmatprep.subr.mxu0 0.0
    %235 = vmatpush1.msra.mxu0 0.0
    %236 = vmatprep.subr.mxu0 0.0
    %237 = vmatpush1.msra.mxu0 0.0
    %238 = vmatprep.subr.mxu0 0.0
    %239 = vmatpush1.msra.mxu0 0.0
    %240 = vmatprep.subr.mxu0 0.0
    %241 = vmatpush1.msra.mxu0 0.0
    %242 = vmatprep.subr.mxu0 0.0
    %243 = vmatpush1.msra.mxu0 0.0
    %244 = vmatprep.subr.mxu0 0.0
    %245 = vmatpush1.msra.mxu0 0.0
    %246 = vmatprep.subr.mxu0 0.0
    %247 = vmatpush1.msra.mxu0 0.0
    %248 = vmatprep.subr.mxu0 0.0
    %249 = vmatpush1.msra.mxu0 0.0
    %250 = vmatprep.subr.mxu0 0.0
    %251 = vmatpush1.msra.mxu0 0.0
    %252 = vmatprep.subr.mxu0 0.0
    %253 = vmatpush1.msra.mxu0 0.0
    %254 = vmatprep.subr.mxu0 0.0
    %255 = vmatpush1.msra.mxu0 0.0
    %256 = vmatprep.subr.mxu0 0.0
    %257 = vmatpush1.msra.mxu0 0.0
    %258 = vmatprep.subr.mxu0 0.0
    %259 = vmatpush1.msra.mxu0 0.0
    %260 = vmatprep.subr.mxu0 0.0
    %261 = vmatpush1.msra.mxu0 0.0
    %262 = vmatprep.subr.mxu0 0.0
    %263 = vmatpush1.msra.mxu0 0.0
    %264 = vmatprep.subr.mxu0 0.0
    %265 = vmatpush1.msra.mxu0 0.0
    %266 = vmatprep.subr.mxu0 0.0
    %267 = vmatpush1.msra.mxu0 0.0
    %268 = vmatprep.subr.mxu0 0.0
    %269 = vmatpush1.msra.mxu0 0.0
    %270 = vmatprep.subr.mxu0 0.0
    %271 = vmatpush1.msra.mxu0 0.0
    %272 = vmatprep.subr.mxu0 0.0
    %273 = vmatpush1.msra.mxu0 0.0
    %274 = vmatprep.subr.mxu0 0.0
    %275 = vmatpush1.msra.mxu0 0.0
    %276 = vmatprep.subr.mxu0 0.0
    %277 = vmatpush1.msra.mxu0 0.0
    %278 = vmatprep.subr.mxu0 0.0
    %279 = vmatpush1.msra.mxu0 0.0
    %280 = vmatprep.subr.mxu0 0.0
    %281 = vmatpush1.msra.mxu0 0.0
    %282 = vmatprep.subr.mxu0 0.0
    %283 = vmatpush1.msra.mxu0 0.0
    %284 = vmatprep.subr.mxu0 0.0
    %285 = vmatpush1.msra.mxu0 0.0
    %286 = vmatprep.subr.mxu0 0.0
    %287 = vmatpush1.msra.mxu0 0.0
    %288 = vmatprep.mubr.f32.mxu0 0.0
    %289 = vmatmul.mubr.f32.gmra.mrb[0].mxu0 %v219
    %v290 = vpop.f32.mrb[0].mxu0
    %v291 = vadd.f32 %v217, %v290
    %v292 = vpop.f32.mrb[0].mxu0
    %293 = vmatprep.mubr.f32.mxu0 0.0
    %294 = vmatmul.mubr.f32.gmra.mrb[0].mxu0 %v222
    %v295 = vpop.f32.mrb[0].mxu0
    %v296 = vadd.f32 %v217, %v295
    %v297 = vpop.f32.mrb[0].mxu0
    %298 = vdwg.mxu0
    %v299 = vmax.f32 %v291, 0.0
    %v300 = vmax.f32 %v296, 0.0
    %v301 = vlaneseq
    %v302 = vshrl.u32 %v301, 7
    %v303 = vsub.s32 0, %v302
    %v304 = vrot.slane %v44, %v303
    %vm305 = vcmask 523264
    %v307 = vsel %vm305, %v299, 0
    %v310 = vsel %vm305, %v300, 0
    %312 = vmatprep.subr.mxu0 0.0
    %313 = vmatpush1.msra.mxu0 %v32
    %314 = vmatprep.subr.mxu0 0.0
    %315 = vmatpush1.msra.mxu0 %v33
    %316 = vmatprep.subr.mxu0 0.0
    %317 = vmatpush1.msra.mxu0 %v34
    %318 = vmatprep.subr.mxu0 0.0
    %319 = vmatpush1.msra.mxu0 %v35
    %320 = vmatprep.subr.mxu0 0.0
    %321 = vmatpush1.msra.mxu0 %v36
    %322 = vmatprep.subr.mxu0 0.0
    %323 = vmatpush1.msra.mxu0 %v37
    %324 = vmatprep.subr.mxu0 0.0
    %325 = vmatpush1.msra.mxu0 %v38
    %326 = vmatprep.subr.mxu0 0.0
    %327 = vmatpush1.msra.mxu0 %v39
    %328 = vmatprep.subr.mxu0 0.0
    %329 = vmatpush1.msra.mxu0 0.0
    %330 = vmatprep.subr.mxu0 0.0
    %331 = vmatpush1.msra.mxu0 0.0
    %332 = vmatprep.subr.mxu0 0.0
    %333 = vmatpush1.msra.mxu0 0.0
    %334 = vmatprep.subr.mxu0 0.0
    %335 = vmatpush1.msra.mxu0 0.0
    %336 = vmatprep.subr.mxu0 0.0
    %337 = vmatpush1.msra.mxu0 0.0
    %338 = vmatprep.subr.mxu0 0.0
    %339 = vmatpush1.msra.mxu0 0.0
    %340 = vmatprep.subr.mxu0 0.0
    %341 = vmatpush1.msra.mxu0 0.0
    %342 = vmatprep.subr.mxu0 0.0
    %343 = vmatpush1.msra.mxu0 0.0
    %344 = vmatprep.subr.mxu0 0.0
    %345 = vmatpush1.msra.mxu0 0.0
    %346 = vmatprep.subr.mxu0 0.0
    %347 = vmatpush1.msra.mxu0 0.0
    %348 = vmatprep.subr.mxu0 0.0
    %349 = vmatpush1.msra.mxu0 0.0
    %350 = vmatprep.subr.mxu0 0.0
    %351 = vmatpush1.msra.mxu0 0.0
    %352 = vmatprep.subr.mxu0 0.0
    %353 = vmatpush1.msra.mxu0 0.0
    %354 = vmatprep.subr.mxu0 0.0
    %355 = vmatpush1.msra.mxu0 0.0
    %356 = vmatprep.subr.mxu0 0.0
    %357 = vmatpush1.msra.mxu0 0.0
    %358 = vmatprep.subr.mxu0 0.0
    %359 = vmatpush1.msra.mxu0 0.0
    %360 = vmatprep.subr.mxu0 0.0
    %361 = vmatpush1.msra.mxu0 0.0
    %362 = vmatprep.subr.mxu0 0.0
    %363 = vmatpush1.msra.mxu0 0.0
    %364 = vmatprep.subr.mxu0 0.0
    %365 = vmatpush1.msra.mxu0 0.0
    %366 = vmatprep.subr.mxu0 0.0
    %367 = vmatpush1.msra.mxu0 0.0
    %368 = vmatprep.subr.mxu0 0.0
    %369 = vmatpush1.msra.mxu0 0.0
    %370 = vmatprep.subr.mxu0 0.0
    %371 = vmatpush1.msra.mxu0 0.0
    %372 = vmatprep.subr.mxu0 0.0
    %373 = vmatpush1.msra.mxu0 0.0
    %374 = vmatprep.subr.mxu0 0.0
    %375 = vmatpush1.msra.mxu0 0.0
    %376 = vmatprep.mubr.f32.mxu0 0.0
    %377 = vmatmul.mubr.f32.gmra.mrb[0].mxu0 %v307
    %v378 = vpop.f32.mrb[0].mxu0
    %v379 = vadd.f32 %v304, %v378
    %v380 = vpop.f32.mrb[0].mxu0
    %381 = vmatprep.mubr.f32.mxu0 0.0
    %382 = vmatmul.mubr.f32.gmra.mrb[0].mxu0 %v310
    %v383 = vpop.f32.mrb[0].mxu0
    %v384 = vadd.f32 %v304, %v383
    %v385 = vpop.f32.mrb[0].mxu0
    %386 = vdwg.mxu0
    %v387 = vadd.f32 %v212, %v379
    %v388 = vadd.f32 %v213, %v384
    %v389 = vsel %vm47, %v387, 0.0
    %390 = vadd.xlane.f32.xlu0 %v389
    %v391 = vpop.xlane.xlu0 %390
    %v392 = vsel %vm47, %v388, 0.0
    %393 = vadd.xlane.f32.xlu0 %v392
    %v394 = vpop.xlane.xlu0 %393
    %v395 = vmul.f32 %v391, %v171
    %v396 = vmul.f32 %v394, %v171
    %v397 = vsub.f32 %v387, %v395
    %v398 = vsub.f32 %v388, %v396
    %v399 = vmul.f32 %v397, %v397
    %v400 = vmul.f32 %v398, %v398
    %v401 = vsel %vm47, %v399, 0.0
    %402 = vadd.xlane.f32.xlu0 %v401
    %v403 = vpop.xlane.xlu0 %402
    %v404 = vsel %vm47, %v400, 0.0
    %405 = vadd.xlane.f32.xlu0 %v404
    %v406 = vpop.xlane.xlu0 %405
    %v407 = vmul.f32 %v403, %v171
    %v408 = vmul.f32 %v406, %v171
    %v409 = vadd.f32 %v407, 1e-05
    %v410 = vadd.f32 %v408, 1e-05
    %v411 = vrsqrt.pop %v409
    %v412 = vrsqrt.pop %v410
    %v413 = vmul.f32 %v397, %v411
    %v414 = vmul.f32 %v398, %v412
    %v415 = vlaneseq
    %v416 = vshrl.u32 %v415, 7
    %v417 = vsub.s32 0, %v416
    %v418 = vrot.slane %v45, %v417
    %v419 = vmul.f32 %v413, %v418
    %v420 = vmul.f32 %v414, %v418
    %v421 = vlaneseq
    %v422 = vshrl.u32 %v421, 7
    %v423 = vsub.s32 0, %v422
    %v424 = vrot.slane %v46, %v423
    %v425 = vadd.f32 %v419, %v424
    %v426 = vadd.f32 %v420, %v424
    %427 = vst.msk [vmem:[#allocation3] sm:$0xff] %vm47, %v425
    %428 = vst.msk [vmem:[#allocation3 + $0x8] sm:$0xff] %vm47, %v426
    // Predicated region
    $region18: #{hollow_transformer_layer.1} parent=1 // pred_check
      _
    $region19: #{hollow_transformer_layer.1} parent=1 // pred_check_branch
      %430 = sbr.rel (0) target = $region21
    $region20: #{hollow_transformer_layer.1} parent=1 // pred_region
      %s432 = ssub.s32 256, 256
      %433 = vsyncadd [#allocation4], %s432
      %s434 = sshll.u32 [#allocation3], 4
      %s435 = int_to_ptr.vmem [resolvable:$true] %s434
      %440 = dma.vmem_to_hbm [thread:$0]  %s435, 256, %s4, [#allocation4], 128, 128, 8
    $region21: #{hollow_transformer_layer.1} parent=1 // pred_fallthru
      _
    // Predicated region
    $region22: #{hollow_transformer_layer.1} parent=1 // pred_check
      _
    $region23: #{hollow_transformer_layer.1} parent=1 // pred_check_branch
      %442 = sbr.rel (0) target = $region25
    $region24: #{hollow_transformer_layer.1} parent=1 // pred_region
      %443 = dma.done [#allocation4], 256
    $region25: #{hollow_transformer_layer.1} parent=1 // pred_fallthru
      _
    %444 = vsyncpa [#allocation4], 1

</llo_original>
